<compile_context>
chip_gen: v7x
topology: tpu7x:2x2x1
jax: 0.10.0
libtpu: 0.0.40
codegen_flags: <defaults>
</compile_context>

<pallas_src>
import functools

import jax
import jax.numpy as jnp
import numpy as np
from jax import lax
from jax.experimental import pallas as pl
from jax.experimental.pallas import tpu as pltpu

BN_EPS = 1e-5


def _bottleneck_kernel(x_ref, mask_ref, w1_ref, b1_ref, w2_ref, b2_ref,
                       w3_ref, b3_ref, o_ref, *, W, L):
    x = x_ref[0]                                            # (Cin, L), lane-dense f32

    # --- conv1 (1x1, BN1 scale folded into w1) + bias + ReLU -----------------
    # w1 is zero-padded on its output-channel axis to wp = round_up(width, 8)
    # so the im2col sublane concatenation below stays 8-aligned; pad rows of
    # h1 are exactly zero (zero weights, zero bias, ReLU).
    h1 = jnp.dot(w1_ref[...], x, preferred_element_type=jnp.float32)
    h1 = jnp.maximum(h1 + b1_ref[...], 0.0)                 # (wp, L)

    # --- conv2 (3x3, pad=1, stride=1) as ONE im2col matmul -------------------
    # Each tap is a static circular lane roll of h1 (XLU) times a precomputed
    # 0/1 edge mask (wrapper constant).  Taps stack along sublanes at
    # 8-aligned offsets -> register-resident (9*wp, L) slab, one MXU dot.
    masks = mask_ref[...]                                   # (9, L)
    taps = []
    t = 0
    for kh in range(3):
        for kw in range(3):
            d = (kh - 1) * W + (kw - 1)
            if d == 0:
                taps.append(h1)                             # center tap: mask is all-ones
            else:
                shifted = pltpu.roll(h1, shift=(-d) % L, axis=1)
                taps.append(shifted * masks[t:t + 1, :])
            t += 1
    im2col = jnp.concatenate(taps, axis=0)                  # (9*wp, L)

    h2 = jnp.dot(w2_ref[...], im2col, preferred_element_type=jnp.float32)
    h2 = jnp.maximum(h2 + b2_ref[...], 0.0)                 # (width, L)

    # --- conv3 (1x1, BN3 scale folded) + bias + identity residual + ReLU -----
    h3 = jnp.dot(w3_ref[...], h2, preferred_element_type=jnp.float32)
    h3 = h3 + b3_ref[...]                                   # (Cout, L)
    o_ref[0] = jnp.maximum(h3 + x, 0.0).astype(o_ref.dtype)


def _edge_masks(H, W, Nb):
    """Precompute the 9 (one per 3x3 tap) 0/1 edge masks over L = Nb*H*W lanes."""
    HW = H * W
    L = Nb * HW
    pos = np.arange(L)
    p = pos % HW                       # position within each image
    row = p // W
    col = p % W
    masks = np.ones((9, L), np.float32)
    t = 0
    for kh in range(3):
        for kw in range(3):
            dh, dw = kh - 1, kw - 1
            valid = np.ones(L, dtype=bool)
            if dh == -1:
                valid &= row >= 1
            if dh == 1:
                valid &= row <= H - 2
            if dw == -1:
                valid &= col >= 1
            if dw == 1:
                valid &= col <= W - 2
            masks[t] = valid.astype(np.float32)
            t += 1
    return jnp.asarray(masks)


def bottleneck_pallas(x_nchw, params, images_per_step=None):
    """x_nchw: (N, C, H, W) float32.  params: kernel-layout weights (prepare_params)."""
    N, Cin, H, W = x_nchw.shape
    HW = H * W
    w1, b1 = params["w1"], params["b1"]        # (wp, Cin), (wp, 1)
    w2, b2 = params["w2"], params["b2"]        # (width, 9*wp), (width, 1)
    w3, b3 = params["w3"], params["b3"]        # (Cout, width), (Cout, 1)
    wp = w1.shape[0]
    width = w2.shape[0]
    Cout = w3.shape[0]
    assert Cin == Cout, "residual add requires inplanes == planes * expansion"
    assert w2.shape[1] == 9 * wp and w3.shape[1] == width
    # Edge-mask construction is only valid for the spec's defaults.
    # TODO(synk): stride=2 / dilated / grouped conv2 and downsample branch not supported.

    # Batching: fold Nb images onto the lane axis per grid step.  Default keeps
    # >= 2 grid steps (both v7x TensorCores) when N >= 2.
    if images_per_step is None:
        images_per_step = max(1, N // 2)
    images_per_step = max(1, min(images_per_step, N))
    while N % images_per_step:
        images_per_step -= 1
    Nb = images_per_step
    G = N // Nb
    L = Nb * HW

    if Nb == 1:
        # Free view: NCHW is already contiguous as (N, C, H*W).
        x_steps = x_nchw.reshape(G, Cin, L)
    else:
        x_steps = (x_nchw.reshape(G, Nb, Cin, HW)
                   .transpose(0, 2, 1, 3).reshape(G, Cin, L))

    masks = _edge_masks(H, W, Nb)

    kernel = functools.partial(_bottleneck_kernel, W=W, L=L)

    grid_spec = pltpu.PrefetchScalarGridSpec(
        num_scalar_prefetch=0,
        grid=(G,),
        in_specs=[
            pl.BlockSpec((1, Cin, L), lambda n: (n, 0, 0)),
            pl.BlockSpec((9, L), lambda n: (0, 0)),
            pl.BlockSpec((wp, Cin), lambda n: (0, 0)),
            pl.BlockSpec((wp, 1), lambda n: (0, 0)),
            pl.BlockSpec((width, 9 * wp), lambda n: (0, 0)),
            pl.BlockSpec((width, 1), lambda n: (0, 0)),
            pl.BlockSpec((Cout, width), lambda n: (0, 0)),
            pl.BlockSpec((Cout, 1), lambda n: (0, 0)),
        ],
        out_specs=pl.BlockSpec((1, Cout, L), lambda n: (n, 0, 0)),
    )

    out_steps = pl.pallas_call(
        kernel,
        out_shape=jax.ShapeDtypeStruct((G, Cout, L), x_nchw.dtype),
        grid_spec=grid_spec,
        compiler_params=pltpu.CompilerParams(
            dimension_semantics=("parallel",)),
    )(x_steps, masks, w1, b1, w2, b2, w3, b3)

    if Nb == 1:
        return out_steps.reshape(N, Cout, H, W)
    return (out_steps.reshape(G, Cout, Nb, HW)
            .transpose(0, 2, 1, 3).reshape(N, Cout, H, W))


# ---------------------------------------------------------------------------
# Parameter preparation: fold BN running stats into conv weights / biases and
# lay the weights out for the spatial-on-lanes kernel.
# ---------------------------------------------------------------------------
def _bn_fold(gamma, beta, mean, var):
    scale = gamma / jnp.sqrt(var + BN_EPS)
    bias = beta - mean * scale
    return scale, bias


def prepare_params(torch_params, sublane=8):
    w1_t, w2_t, w3_t = torch_params["w1_t"], torch_params["w2_t"], torch_params["w3_t"]
    s1, b1 = _bn_fold(*torch_params["bn1"])
    s2, b2 = _bn_fold(*torch_params["bn2"])
    s3, b3 = _bn_fold(*torch_params["bn3"])

    width, cin = w1_t.shape[0], w1_t.shape[1]
    wp = ((width + sublane - 1) // sublane) * sublane      # sublane-aligned channel pad

    # conv1: (width, Cin) scaled by BN1, zero-padded to wp output rows.
    w1 = w1_t[:, :, 0, 0] * s1[:, None]
    w1 = jnp.zeros((wp, cin), jnp.float32).at[:width].set(w1)
    b1v = jnp.zeros((wp, 1), jnp.float32).at[:width, 0].set(b1)

    # conv2: im2col layout (width, 9*wp), column index = (kh*3 + kw)*wp + ci.
    w2 = jnp.transpose(w2_t, (0, 2, 3, 1)) * s2[:, None, None, None]   # (co, kh, kw, ci)
    w2 = jnp.zeros((width, 3, 3, wp), jnp.float32).at[:, :, :, :width].set(w2)
    w2 = w2.reshape(width, 9 * wp)
    b2v = b2[:, None]

    # conv3: (Cout, width) scaled by BN3.
    w3 = w3_t[:, :, 0, 0] * s3[:, None]
    b3v = b3[:, None]

    return {"w1": w1, "b1": b1v, "w2": w2, "b2": b2v, "w3": w3, "b3": b3v}


# ---------------------------------------------------------------------------
# Pure-JAX reference (mirrors the PyTorch module exactly, NCHW / OIHW).
# ---------------------------------------------------------------------------
def bottleneck_reference(x, torch_params):
    w1_t, w2_t, w3_t = torch_params["w1_t"], torch_params["w2_t"], torch_params["w3_t"]
    dn = ("NCHW", "OIHW", "NCHW")

    def bn(y, key):
        g, b, m, v = torch_params[key]
        s, bi = _bn_fold(g, b, m, v)
        return y * s[None, :, None, None] + bi[None, :, None, None]

    out = lax.conv_general_dilated(x, w1_t, (1, 1), "VALID", dimension_numbers=dn)
    out = jnp.maximum(bn(out, "bn1"), 0.0)
    out = lax.conv_general_dilated(out, w2_t, (1, 1), ((1, 1), (1, 1)),
                                   dimension_numbers=dn)
    out = jnp.maximum(bn(out, "bn2"), 0.0)
    out = lax.conv_general_dilated(out, w3_t, (1, 1), "VALID", dimension_numbers=dn)
    out = bn(out, "bn3")
    return jnp.maximum(out + x, 0.0)


if __name__ == "__main__":
    key = jax.random.PRNGKey(0)

    # Module config: Bottleneck(inplanes=16, planes=4) -> width=4, out=16.
    inplanes, planes = 16, 4
    width = planes               # base_width=64, groups=1
    cout = planes * 4            # expansion = 4
    N, H, W = 2, 16, 16

    keys = jax.random.split(key, 16)
    x = jax.random.normal(keys[0], (N, inplanes, H, W), jnp.float32)

    # PyTorch-shaped parameters (deterministic synthetic init).
    w1_t = 0.1 * jax.random.normal(keys[1], (width, inplanes, 1, 1), jnp.float32)
    w2_t = 0.1 * jax.random.normal(keys[2], (width, width, 3, 3), jnp.float32)
    w3_t = 0.1 * jax.random.normal(keys[3], (cout, width, 1, 1), jnp.float32)

    def bn_params(kg, kb, km, kv, c):
        gamma = 0.5 + jax.random.uniform(kg, (c,), jnp.float32)
        beta = 0.1 * jax.random.normal(kb, (c,), jnp.float32)
        mean = 0.1 * jax.random.normal(km, (c,), jnp.float32)
        var = 0.5 + jax.random.uniform(kv, (c,), jnp.float32)
        return gamma, beta, mean, var

    bn1 = bn_params(keys[4], keys[5], keys[6], keys[7], width)
    bn2 = bn_params(keys[8], keys[9], keys[10], keys[11], width)
    bn3 = bn_params(keys[12], keys[13], keys[14], keys[15], cout)

    torch_params = {"w1_t": w1_t, "w2_t": w2_t, "w3_t": w3_t,
                    "bn1": bn1, "bn2": bn2, "bn3": bn3}
    params = prepare_params(torch_params)

    out = jax.block_until_ready(bottleneck_pallas(x, params))
    ref = jax.block_until_ready(bottleneck_reference(x, torch_params))

    np.testing.assert_allclose(np.asarray(out), np.asarray(ref),
                               rtol=2e-4, atol=2e-4)
    print("KERNEL_OK")
</pallas_src>

<mosaic_0001>
module attributes {stable_mosaic.version = 11 : i64} {
  func.func @_bottleneck_kernel(%arg0: i32, %arg1: memref<1x16x256xf32, #tpu.memory_space<vmem>>, %arg2: memref<9x256xf32, #tpu.memory_space<vmem>>, %arg3: memref<8x16xf32, #tpu.memory_space<vmem>>, %arg4: memref<8x1xf32, #tpu.memory_space<vmem>>, %arg5: memref<4x72xf32, #tpu.memory_space<vmem>>, %arg6: memref<4x1xf32, #tpu.memory_space<vmem>>, %arg7: memref<16x4xf32, #tpu.memory_space<vmem>>, %arg8: memref<16x1xf32, #tpu.memory_space<vmem>>, %arg9: memref<1x16x256xf32, #tpu.memory_space<vmem>>) attributes {dimension_semantics = [#tpu.dimension_semantics<parallel>], iteration_bounds = array<i64: 2>, scalar_prefetch = 0 : i64, scratch_operands = 0 : i64, tpu.core_type = #tpu.core_type<tc>, window_params = [{transform_indices = @transform_0, window_bounds = array<i64: 1, 16, 256>}, {pipeline_mode = #tpu.pipeline_mode<synchronous>, transform_indices = @transform_1, window_bounds = array<i64: 9, 256>}, {pipeline_mode = #tpu.pipeline_mode<synchronous>, transform_indices = @transform_2, window_bounds = array<i64: 8, 16>}, {pipeline_mode = #tpu.pipeline_mode<synchronous>, transform_indices = @transform_3, window_bounds = array<i64: 8, 1>}, {pipeline_mode = #tpu.pipeline_mode<synchronous>, transform_indices = @transform_4, window_bounds = array<i64: 4, 72>}, {pipeline_mode = #tpu.pipeline_mode<synchronous>, transform_indices = @transform_5, window_bounds = array<i64: 4, 1>}, {pipeline_mode = #tpu.pipeline_mode<synchronous>, transform_indices = @transform_6, window_bounds = array<i64: 16, 4>}, {pipeline_mode = #tpu.pipeline_mode<synchronous>, transform_indices = @transform_7, window_bounds = array<i64: 16, 1>}, {transform_indices = @transform_8, window_bounds = array<i64: 1, 16, 256>}]} {
    %c0 = arith.constant 0 : index
    %c0_0 = arith.constant 0 : index
    %c0_1 = arith.constant 0 : index
    %0 = vector.load %arg1[%c0, %c0_0, %c0_1] : memref<1x16x256xf32, #tpu.memory_space<vmem>>, vector<1x16x256xf32>
    %1 = vector.shape_cast %0 : vector<1x16x256xf32> to vector<16x256xf32>
    %c0_2 = arith.constant 0 : index
    %c0_3 = arith.constant 0 : index
    %2 = vector.load %arg3[%c0_2, %c0_3] : memref<8x16xf32, #tpu.memory_space<vmem>>, vector<8x16xf32>
    %cst = arith.constant dense<0.000000e+00> : vector<8x256xf32>
    %3 = tpu.matmul %2, %1, %cst {dimension_numbers = #tpu.dot_dimension_numbers<[1], [0], [0], [1], [0, 0, 1, 1], [], []>} : vector<8x16xf32>, vector<16x256xf32>, vector<8x256xf32> -> vector<8x256xf32>
    %c0_4 = arith.constant 0 : index
    %c0_5 = arith.constant 0 : index
    %4 = vector.load %arg4[%c0_4, %c0_5] : memref<8x1xf32, #tpu.memory_space<vmem>>, vector<8x1xf32>
    %5 = vector.broadcast %4 : vector<8x1xf32> to vector<8x256xf32>
    %6 = arith.addf %3, %5 : vector<8x256xf32>
    %cst_6 = arith.constant 0.000000e+00 : f32
    %7 = vector.broadcast %cst_6 : f32 to vector<8x256xf32>
    %8 = arith.maximumf %6, %7 : vector<8x256xf32>
    %c0_7 = arith.constant 0 : index
    %c0_8 = arith.constant 0 : index
    %9 = vector.load %arg2[%c0_7, %c0_8] : memref<9x256xf32, #tpu.memory_space<vmem>>, vector<9x256xf32>
    %c17_i32 = arith.constant 17 : i32
    %10 = tpu.dynamic_rotate %8 by %c17_i32 dim 1 : vector<8x256xf32>, i32 -> vector<8x256xf32>
    %11 = vector.extract_strided_slice %9 {offsets = [0, 0], sizes = [1, 256], strides = [1, 1]} : vector<9x256xf32> to vector<1x256xf32>
    %12 = vector.broadcast %11 : vector<1x256xf32> to vector<8x256xf32>
    %13 = arith.mulf %10, %12 : vector<8x256xf32>
    %c16_i32 = arith.constant 16 : i32
    %14 = tpu.dynamic_rotate %8 by %c16_i32 dim 1 : vector<8x256xf32>, i32 -> vector<8x256xf32>
    %15 = vector.extract_strided_slice %9 {offsets = [1, 0], sizes = [1, 256], strides = [1, 1]} : vector<9x256xf32> to vector<1x256xf32>
    %16 = vector.broadcast %15 : vector<1x256xf32> to vector<8x256xf32>
    %17 = arith.mulf %14, %16 : vector<8x256xf32>
    %c15_i32 = arith.constant 15 : i32
    %18 = tpu.dynamic_rotate %8 by %c15_i32 dim 1 : vector<8x256xf32>, i32 -> vector<8x256xf32>
    %19 = vector.extract_strided_slice %9 {offsets = [2, 0], sizes = [1, 256], strides = [1, 1]} : vector<9x256xf32> to vector<1x256xf32>
    %20 = vector.broadcast %19 : vector<1x256xf32> to vector<8x256xf32>
    %21 = arith.mulf %18, %20 : vector<8x256xf32>
    %c1_i32 = arith.constant 1 : i32
    %22 = tpu.dynamic_rotate %8 by %c1_i32 dim 1 : vector<8x256xf32>, i32 -> vector<8x256xf32>
    %23 = vector.extract_strided_slice %9 {offsets = [3, 0], sizes = [1, 256], strides = [1, 1]} : vector<9x256xf32> to vector<1x256xf32>
    %24 = vector.broadcast %23 : vector<1x256xf32> to vector<8x256xf32>
    %25 = arith.mulf %22, %24 : vector<8x256xf32>
    %c255_i32 = arith.constant 255 : i32
    %26 = tpu.dynamic_rotate %8 by %c255_i32 dim 1 : vector<8x256xf32>, i32 -> vector<8x256xf32>
    %27 = vector.extract_strided_slice %9 {offsets = [5, 0], sizes = [1, 256], strides = [1, 1]} : vector<9x256xf32> to vector<1x256xf32>
    %28 = vector.broadcast %27 : vector<1x256xf32> to vector<8x256xf32>
    %29 = arith.mulf %26, %28 : vector<8x256xf32>
    %c241_i32 = arith.constant 241 : i32
    %30 = tpu.dynamic_rotate %8 by %c241_i32 dim 1 : vector<8x256xf32>, i32 -> vector<8x256xf32>
    %31 = vector.extract_strided_slice %9 {offsets = [6, 0], sizes = [1, 256], strides = [1, 1]} : vector<9x256xf32> to vector<1x256xf32>
    %32 = vector.broadcast %31 : vector<1x256xf32> to vector<8x256xf32>
    %33 = arith.mulf %30, %32 : vector<8x256xf32>
    %c240_i32 = arith.constant 240 : i32
    %34 = tpu.dynamic_rotate %8 by %c240_i32 dim 1 : vector<8x256xf32>, i32 -> vector<8x256xf32>
    %35 = vector.extract_strided_slice %9 {offsets = [7, 0], sizes = [1, 256], strides = [1, 1]} : vector<9x256xf32> to vector<1x256xf32>
    %36 = vector.broadcast %35 : vector<1x256xf32> to vector<8x256xf32>
    %37 = arith.mulf %34, %36 : vector<8x256xf32>
    %c239_i32 = arith.constant 239 : i32
    %38 = tpu.dynamic_rotate %8 by %c239_i32 dim 1 : vector<8x256xf32>, i32 -> vector<8x256xf32>
    %39 = vector.extract_strided_slice %9 {offsets = [8, 0], sizes = [1, 256], strides = [1, 1]} : vector<9x256xf32> to vector<1x256xf32>
    %40 = vector.broadcast %39 : vector<1x256xf32> to vector<8x256xf32>
    %41 = arith.mulf %38, %40 : vector<8x256xf32>
    %42 = tpu.concatenate %13, %17, %21, %25, %8, %29, %33, %37, %41 in 0 : vector<8x256xf32>, vector<8x256xf32>, vector<8x256xf32>, vector<8x256xf32>, vector<8x256xf32>, vector<8x256xf32>, vector<8x256xf32>, vector<8x256xf32>, vector<8x256xf32> -> vector<72x256xf32>
    %c0_9 = arith.constant 0 : index
    %c0_10 = arith.constant 0 : index
    %43 = vector.load %arg5[%c0_9, %c0_10] : memref<4x72xf32, #tpu.memory_space<vmem>>, vector<4x72xf32>
    %cst_11 = arith.constant dense<0.000000e+00> : vector<4x256xf32>
    %44 = tpu.matmul %43, %42, %cst_11 {dimension_numbers = #tpu.dot_dimension_numbers<[1], [0], [0], [1], [0, 0, 1, 1], [], []>} : vector<4x72xf32>, vector<72x256xf32>, vector<4x256xf32> -> vector<4x256xf32>
    %c0_12 = arith.constant 0 : index
    %c0_13 = arith.constant 0 : index
    %45 = vector.load %arg6[%c0_12, %c0_13] : memref<4x1xf32, #tpu.memory_space<vmem>>, vector<4x1xf32>
    %46 = vector.broadcast %45 : vector<4x1xf32> to vector<4x256xf32>
    %47 = arith.addf %44, %46 : vector<4x256xf32>
    %cst_14 = arith.constant 0.000000e+00 : f32
    %48 = vector.broadcast %cst_14 : f32 to vector<4x256xf32>
    %49 = arith.maximumf %47, %48 : vector<4x256xf32>
    %c0_15 = arith.constant 0 : index
    %c0_16 = arith.constant 0 : index
    %50 = vector.load %arg7[%c0_15, %c0_16] : memref<16x4xf32, #tpu.memory_space<vmem>>, vector<16x4xf32>
    %cst_17 = arith.constant dense<0.000000e+00> : vector<16x256xf32>
    %51 = tpu.matmul %50, %49, %cst_17 {dimension_numbers = #tpu.dot_dimension_numbers<[1], [0], [0], [1], [0, 0, 1, 1], [], []>} : vector<16x4xf32>, vector<4x256xf32>, vector<16x256xf32> -> vector<16x256xf32>
    %c0_18 = arith.constant 0 : index
    %c0_19 = arith.constant 0 : index
    %52 = vector.load %arg8[%c0_18, %c0_19] : memref<16x1xf32, #tpu.memory_space<vmem>>, vector<16x1xf32>
    %53 = vector.broadcast %52 : vector<16x1xf32> to vector<16x256xf32>
    %54 = arith.addf %51, %53 : vector<16x256xf32>
    %55 = arith.addf %54, %1 : vector<16x256xf32>
    %cst_20 = arith.constant 0.000000e+00 : f32
    %56 = vector.broadcast %cst_20 : f32 to vector<16x256xf32>
    %57 = arith.maximumf %55, %56 : vector<16x256xf32>
    %c0_21 = arith.constant 0 : index
    %c0_22 = arith.constant 0 : index
    %c0_23 = arith.constant 0 : index
    %58 = vector.load %arg9[%c0_21, %c0_22, %c0_23] : memref<1x16x256xf32, #tpu.memory_space<vmem>>, vector<1x16x256xf32>
    %59 = vector.shape_cast %58 : vector<1x16x256xf32> to vector<16x256xf32>
    %60 = vector.shape_cast %57 : vector<16x256xf32> to vector<1x16x256xf32>
    tpu.vector_store %arg9[%c0_21, %c0_22, %c0_23], %60 {strides = array<i32>} : memref<1x16x256xf32, #tpu.memory_space<vmem>>, vector<1x16x256xf32>,
    return
  }
  func.func @transform_0(%arg0: i32) -> (i32, i32, i32) {
    %c0_i32 = arith.constant 0 : i32
    %c0_i32_0 = arith.constant 0 : i32
    %c0_i32_1 = arith.constant 0 : i32
    return %arg0, %c0_i32, %c0_i32_0 : i32, i32, i32
  }
  func.func @transform_1(%arg0: i32) -> (i32, i32) {
    %c0_i32 = arith.constant 0 : i32
    %c0_i32_0 = arith.constant 0 : i32
    %c0_i32_1 = arith.constant 0 : i32
    return %c0_i32, %c0_i32_0 : i32, i32
  }
  func.func @transform_2(%arg0: i32) -> (i32, i32) {
    %c0_i32 = arith.constant 0 : i32
    %c0_i32_0 = arith.constant 0 : i32
    %c0_i32_1 = arith.constant 0 : i32
    return %c0_i32, %c0_i32_0 : i32, i32
  }
  func.func @transform_3(%arg0: i32) -> (i32, i32) {
    %c0_i32 = arith.constant 0 : i32
    %c0_i32_0 = arith.constant 0 : i32
    %c0_i32_1 = arith.constant 0 : i32
    return %c0_i32, %c0_i32_0 : i32, i32
  }
  func.func @transform_4(%arg0: i32) -> (i32, i32) {
    %c0_i32 = arith.constant 0 : i32
    %c0_i32_0 = arith.constant 0 : i32
    %c0_i32_1 = arith.constant 0 : i32
    return %c0_i32, %c0_i32_0 : i32, i32
  }
  func.func @transform_5(%arg0: i32) -> (i32, i32) {
    %c0_i32 = arith.constant 0 : i32
    %c0_i32_0 = arith.constant 0 : i32
    %c0_i32_1 = arith.constant 0 : i32
    return %c0_i32, %c0_i32_0 : i32, i32
  }
  func.func @transform_6(%arg0: i32) -> (i32, i32) {
    %c0_i32 = arith.constant 0 : i32
    %c0_i32_0 = arith.constant 0 : i32
    %c0_i32_1 = arith.constant 0 : i32
    return %c0_i32, %c0_i32_0 : i32, i32
  }
  func.func @transform_7(%arg0: i32) -> (i32, i32) {
    %c0_i32 = arith.constant 0 : i32
    %c0_i32_0 = arith.constant 0 : i32
    %c0_i32_1 = arith.constant 0 : i32
    return %c0_i32, %c0_i32_0 : i32, i32
  }
  func.func @transform_8(%arg0: i32) -> (i32, i32, i32) {
    %c0_i32 = arith.constant 0 : i32
    %c0_i32_0 = arith.constant 0 : i32
    %c0_i32_1 = arith.constant 0 : i32
    return %arg0, %c0_i32, %c0_i32_0 : i32, i32, i32
  }
}

</mosaic_0001>

<llo_original>
// kernel: tpu_custom_call.1
$region0: #{tpu_custom_call.1}
  #allocation0 [shape = 'u32[]', space=smem, size = 0x4, offset = 0x4, fixed_abs, tag = 'smem constant byte address 0x4 - core index']
  #allocation1 [shape = 'u32[144,128]{1,0:T(1,128)}', space=vmem, size = 0x12000, scoped, tag = 'internal scratch']
  %s0 = inlined_call_operand.hbm [shape: f32[2,16,256], index: 0, kind: input, shape index: {}]
  %s1 = inlined_call_operand.vmem [shape: f32[9,256], index: 1, kind: input, shape index: {}]
  %s2 = inlined_call_operand.vmem [shape: f32[8,16], index: 2, kind: input, shape index: {}]
  %s3 = inlined_call_operand.vmem [shape: f32[8,1], index: 3, kind: input, shape index: {}]
  %s4 = inlined_call_operand.vmem [shape: f32[4,72], index: 4, kind: input, shape index: {}]
  %s5 = inlined_call_operand.vmem [shape: f32[4,1], index: 5, kind: input, shape index: {}]
  %s6 = inlined_call_operand.vmem [shape: f32[16,4], index: 6, kind: input, shape index: {}]
  %s7 = inlined_call_operand.vmem [shape: f32[16,1], index: 7, kind: input, shape index: {}]
  %s8 = inlined_call_operand.hbm [shape: f32[2,16,256], index: 8, kind: output, shape index: {}]
  %s9 = sld [smem:[#allocation0]]
  $region69: #{tpu_custom_call.1} parent=0
    _
  %s11 = ssub.s32 1, %s9
  %s12 = scalar_select 0, %s11, %s9
  $region1: #{tpu_custom_call.1} parent=0
    #allocation2 [shape = 'u8[32768]{0}', space=vmem, size = 0x8000, scoped, tag = 'input window, operand 0']
    #allocation3 [shape = 's32[2]{0}', space=sflag, size = 0x8, scoped, tag = 'scoped memory for tpu_custom_call.1']
    #allocation4 [shape = 's32[2]{0}', space=sflag, size = 0x8, scoped, tag = 'scoped memory for tpu_custom_call.1']
    #allocation5 [shape = 'u8[32768]{0}', space=vmem, size = 0x8000, scoped, tag = 'output window, operand 0']
    %13 = vsyncpa [#allocation3], 0
    %s14 = scalar_lea.sflag [#allocation3], 1
    %15 = vsyncpa %s14, 0
    %16 = vsyncpa [#allocation4], 0
    %s17 = scalar_lea.sflag [#allocation4], 1
    %18 = vsyncpa %s17, 0
    loop: start=0, step=1, limit=4
    $region2: #{tpu_custom_call.1} parent=1 // loop_pre_header
      _
    $region3: #{tpu_custom_call.1} parent=1 // loop_header
      %s20 = sphi 0, %s24
      %p21 = scmp.ge.s32.totalorder %s20, 4
      %s30 = sphi 0, %s32
      %s33 = sphi 0, %s30
      %s34 = sphi 0, %s33
      %s50 = sphi 0, %s34
      %s54 = sphi 0, %s54
      %s56 = sphi 0, %s54
      %s57 = sphi 0, %s56
      %s71 = sphi 0, %s57
      %s75 = sphi 0, %s75
      %s77 = sphi 0, %s75
      %s78 = sphi 0, %s77
      %s92 = sphi 0, %s78
      %s96 = sphi 0, %s96
      %s98 = sphi 0, %s96
      %s99 = sphi 0, %s98
      %s113 = sphi 0, %s99
      %s117 = sphi 0, %s117
      %s119 = sphi 0, %s117
      %s120 = sphi 0, %s119
      %s134 = sphi 0, %s120
      %s138 = sphi 0, %s138
      %s140 = sphi 0, %s138
      %s141 = sphi 0, %s140
      %s155 = sphi 0, %s141
      %s159 = sphi 0, %s159
      %s161 = sphi 0, %s159
      %s162 = sphi 0, %s161
      %s176 = sphi 0, %s162
      %s180 = sphi 0, %s180
      %s182 = sphi 0, %s180
      %s183 = sphi 0, %s182
      %s197 = sphi 0, %s183
      %s203 = sphi 0, %s205
      %s206 = sphi 0, %s203
      %s207 = sphi 0, %s206
      %s223 = sphi 0, %s207
    $region4: #{tpu_custom_call.1} parent=1 // loop_header_branch
      %23 = sbr.rel (%p21) target = $region8
    $region5: #{tpu_custom_call.1} parent=1 // loop_body
      %s25 = ssub.s32 %s20, 1
      %s26 = ssub.s32 %s20, 2
      %s27 = sadd.s32 %s20, 1
      %s28 = ssub.s32 %s20, %s27
      %p29 = scmp.eq.s32.totalorder %s28, 0
      %s31 = sadd.s32 %s30, 1
      %s32 = scalar_select %p29, %s30, %s31
      %p35 = pneg %p29
      %p36 = scmp.eq.s32.totalorder %s20, 1
      %p37 = por %p35, %p36
      %p38 = scmp.ne.s32.totalorder %s30, %s33
      %p39 = scmp.eq.s32.totalorder %s20, 0
      %p40 = por %p38, %p39
      %p41 = scmp.ne.s32.totalorder %s30, %s33
      %p42 = scmp.eq.s32.totalorder %s25, 1
      %p43 = por %p41, %p42
      %p44 = scmp.ne.s32.totalorder %s33, %s34
      %p45 = scmp.eq.s32.totalorder %s25, 0
      %p46 = por %p44, %p45
      %p47 = scmp.ne.s32.totalorder %s33, %s34
      %p48 = scmp.eq.s32.totalorder %s26, 1
      %p49 = por %p47, %p48
      %p51 = scmp.ne.s32.totalorder %s34, %s50
      %p52 = scmp.eq.s32.totalorder %s26, 0
      %p53 = por %p51, %p52
      %s55 = sadd.s32 %s54, 1
      %p58 = scmp.eq.s32.totalorder %s20, 1
      %p59 = scmp.ne.s32.totalorder %s54, %s56
      %p60 = scmp.eq.s32.totalorder %s20, 0
      %p61 = por %p59, %p60
      %p62 = scmp.ne.s32.totalorder %s54, %s56
      %p63 = scmp.eq.s32.totalorder %s25, 1
      %p64 = por %p62, %p63
      %p65 = scmp.ne.s32.totalorder %s56, %s57
      %p66 = scmp.eq.s32.totalorder %s25, 0
      %p67 = por %p65, %p66
      %p68 = scmp.ne.s32.totalorder %s56, %s57
      %p69 = scmp.eq.s32.totalorder %s26, 1
      %p70 = por %p68, %p69
      %p72 = scmp.ne.s32.totalorder %s57, %s71
      %p73 = scmp.eq.s32.totalorder %s26, 0
      %p74 = por %p72, %p73
      %s76 = sadd.s32 %s75, 1
      %p79 = scmp.eq.s32.totalorder %s20, 1
      %p80 = scmp.ne.s32.totalorder %s75, %s77
      %p81 = scmp.eq.s32.totalorder %s20, 0
      %p82 = por %p80, %p81
      %p83 = scmp.ne.s32.totalorder %s75, %s77
      %p84 = scmp.eq.s32.totalorder %s25, 1
      %p85 = por %p83, %p84
      %p86 = scmp.ne.s32.totalorder %s77, %s78
      %p87 = scmp.eq.s32.totalorder %s25, 0
      %p88 = por %p86, %p87
      %p89 = scmp.ne.s32.totalorder %s77, %s78
      %p90 = scmp.eq.s32.totalorder %s26, 1
      %p91 = por %p89, %p90
      %p93 = scmp.ne.s32.totalorder %s78, %s92
      %p94 = scmp.eq.s32.totalorder %s26, 0
      %p95 = por %p93, %p94
      %s97 = sadd.s32 %s96, 1
      %p100 = scmp.eq.s32.totalorder %s20, 1
      %p101 = scmp.ne.s32.totalorder %s96, %s98
      %p102 = scmp.eq.s32.totalorder %s20, 0
      %p103 = por %p101, %p102
      %p104 = scmp.ne.s32.totalorder %s96, %s98
      %p105 = scmp.eq.s32.totalorder %s25, 1
      %p106 = por %p104, %p105
      %p107 = scmp.ne.s32.totalorder %s98, %s99
      %p108 = scmp.eq.s32.totalorder %s25, 0
      %p109 = por %p107, %p108
      %p110 = scmp.ne.s32.totalorder %s98, %s99
      %p111 = scmp.eq.s32.totalorder %s26, 1
      %p112 = por %p110, %p111
      %p114 = scmp.ne.s32.totalorder %s99, %s113
      %p115 = scmp.eq.s32.totalorder %s26, 0
      %p116 = por %p114, %p115
      %s118 = sadd.s32 %s117, 1
      %p121 = scmp.eq.s32.totalorder %s20, 1
      %p122 = scmp.ne.s32.totalorder %s117, %s119
      %p123 = scmp.eq.s32.totalorder %s20, 0
      %p124 = por %p122, %p123
      %p125 = scmp.ne.s32.totalorder %s117, %s119
      %p126 = scmp.eq.s32.totalorder %s25, 1
      %p127 = por %p125, %p126
      %p128 = scmp.ne.s32.totalorder %s119, %s120
      %p129 = scmp.eq.s32.totalorder %s25, 0
      %p130 = por %p128, %p129
      %p131 = scmp.ne.s32.totalorder %s119, %s120
      %p132 = scmp.eq.s32.totalorder %s26, 1
      %p133 = por %p131, %p132
      %p135 = scmp.ne.s32.totalorder %s120, %s134
      %p136 = scmp.eq.s32.totalorder %s26, 0
      %p137 = por %p135, %p136
      %s139 = sadd.s32 %s138, 1
      %p142 = scmp.eq.s32.totalorder %s20, 1
      %p143 = scmp.ne.s32.totalorder %s138, %s140
      %p144 = scmp.eq.s32.totalorder %s20, 0
      %p145 = por %p143, %p144
      %p146 = scmp.ne.s32.totalorder %s138, %s140
      %p147 = scmp.eq.s32.totalorder %s25, 1
      %p148 = por %p146, %p147
      %p149 = scmp.ne.s32.totalorder %s140, %s141
      %p150 = scmp.eq.s32.totalorder %s25, 0
      %p151 = por %p149, %p150
      %p152 = scmp.ne.s32.totalorder %s140, %s141
      %p153 = scmp.eq.s32.totalorder %s26, 1
      %p154 = por %p152, %p153
      %p156 = scmp.ne.s32.totalorder %s141, %s155
      %p157 = scmp.eq.s32.totalorder %s26, 0
      %p158 = por %p156, %p157
      %s160 = sadd.s32 %s159, 1
      %p163 = scmp.eq.s32.totalorder %s20, 1
      %p164 = scmp.ne.s32.totalorder %s159, %s161
      %p165 = scmp.eq.s32.totalorder %s20, 0
      %p166 = por %p164, %p165
      %p167 = scmp.ne.s32.totalorder %s159, %s161
      %p168 = scmp.eq.s32.totalorder %s25, 1
      %p169 = por %p167, %p168
      %p170 = scmp.ne.s32.totalorder %s161, %s162
      %p171 = scmp.eq.s32.totalorder %s25, 0
      %p172 = por %p170, %p171
      %p173 = scmp.ne.s32.totalorder %s161, %s162
      %p174 = scmp.eq.s32.totalorder %s26, 1
      %p175 = por %p173, %p174
      %p177 = scmp.ne.s32.totalorder %s162, %s176
      %p178 = scmp.eq.s32.totalorder %s26, 0
      %p179 = por %p177, %p178
      %s181 = sadd.s32 %s180, 1
      %p184 = scmp.eq.s32.totalorder %s20, 1
      %p185 = scmp.ne.s32.totalorder %s180, %s182
      %p186 = scmp.eq.s32.totalorder %s20, 0
      %p187 = por %p185, %p186
      %p188 = scmp.ne.s32.totalorder %s180, %s182
      %p189 = scmp.eq.s32.totalorder %s25, 1
      %p190 = por %p188, %p189
      %p191 = scmp.ne.s32.totalorder %s182, %s183
      %p192 = scmp.eq.s32.totalorder %s25, 0
      %p193 = por %p191, %p192
      %p194 = scmp.ne.s32.totalorder %s182, %s183
      %p195 = scmp.eq.s32.totalorder %s26, 1
      %p196 = por %p194, %p195
      %p198 = scmp.ne.s32.totalorder %s183, %s197
      %p199 = scmp.eq.s32.totalorder %s26, 0
      %p200 = por %p198, %p199
      %s201 = ssub.s32 %s20, %s27
      %p202 = scmp.eq.s32.totalorder %s201, 0
      %s204 = sadd.s32 %s203, 1
      %s205 = scalar_select %p202, %s203, %s204
      %p208 = pneg %p202
      %p209 = scmp.eq.s32.totalorder %s20, 1
      %p210 = por %p208, %p209
      %p211 = scmp.ne.s32.totalorder %s203, %s206
      %p212 = scmp.eq.s32.totalorder %s20, 0
      %p213 = por %p211, %p212
      %p214 = scmp.ne.s32.totalorder %s203, %s206
      %p215 = scmp.eq.s32.totalorder %s25, 1
      %p216 = por %p214, %p215
      %p217 = scmp.ne.s32.totalorder %s206, %s207
      %p218 = scmp.eq.s32.totalorder %s25, 0
      %p219 = por %p217, %p218
      %p220 = scmp.ne.s32.totalorder %s206, %s207
      %p221 = scmp.eq.s32.totalorder %s26, 1
      %p222 = por %p220, %p221
      %p224 = scmp.ne.s32.totalorder %s207, %s223
      %p225 = scmp.eq.s32.totalorder %s26, 0
      %p226 = por %p224, %p225
      %p227 = scmp.le.s32.totalorder 1, %s20
      %p228 = scmp.lt.s32.totalorder %s20, 3
      %p229 = pnand %p227, %p228
      %p230 = pneg %p229
      // Predicated region
      $region9: #{tpu_custom_call.1} parent=5 // pred_check
        _
      $region10: #{tpu_custom_call.1} parent=5 // pred_check_branch
        %232 = sbr.rel (%p229) target = $region12
      $region11: #{tpu_custom_call.1} parent=5 // pred_region
        %s233 = ssub.s32 %s20, 1
        // Predicated region
        $region13: #{tpu_custom_call.1} parent=11 // pred_check
          %p234 = pneg %p67
        $region14: #{tpu_custom_call.1} parent=11 // pred_check_branch
          %236 = sbr.rel (%p234) target = $region16
        $region15: #{tpu_custom_call.1} parent=11 // pred_region
          _
        $region16: #{tpu_custom_call.1} parent=11 // pred_fallthru
          _
        // Predicated region
        $region17: #{tpu_custom_call.1} parent=11 // pred_check
          %p237 = pneg %p88
        $region18: #{tpu_custom_call.1} parent=11 // pred_check_branch
          %239 = sbr.rel (%p237) target = $region20
        $region19: #{tpu_custom_call.1} parent=11 // pred_region
          _
        $region20: #{tpu_custom_call.1} parent=11 // pred_fallthru
          _
        // Predicated region
        $region21: #{tpu_custom_call.1} parent=11 // pred_check
          %p240 = pneg %p109
        $region22: #{tpu_custom_call.1} parent=11 // pred_check_branch
          %242 = sbr.rel (%p240) target = $region24
        $region23: #{tpu_custom_call.1} parent=11 // pred_region
          _
        $region24: #{tpu_custom_call.1} parent=11 // pred_fallthru
          _
        // Predicated region
        $region25: #{tpu_custom_call.1} parent=11 // pred_check
          %p243 = pneg %p130
        $region26: #{tpu_custom_call.1} parent=11 // pred_check_branch
          %245 = sbr.rel (%p243) target = $region28
        $region27: #{tpu_custom_call.1} parent=11 // pred_region
          _
        $region28: #{tpu_custom_call.1} parent=11 // pred_fallthru
          _
        // Predicated region
        $region29: #{tpu_custom_call.1} parent=11 // pred_check
          %p246 = pneg %p151
        $region30: #{tpu_custom_call.1} parent=11 // pred_check_branch
          %248 = sbr.rel (%p246) target = $region32
        $region31: #{tpu_custom_call.1} parent=11 // pred_region
          _
        $region32: #{tpu_custom_call.1} parent=11 // pred_fallthru
          _
        // Predicated region
        $region33: #{tpu_custom_call.1} parent=11 // pred_check
          %p249 = pneg %p172
        $region34: #{tpu_custom_call.1} parent=11 // pred_check_branch
          %251 = sbr.rel (%p249) target = $region36
        $region35: #{tpu_custom_call.1} parent=11 // pred_region
          _
        $region36: #{tpu_custom_call.1} parent=11 // pred_fallthru
          _
        // Predicated region
        $region37: #{tpu_custom_call.1} parent=11 // pred_check
          %p252 = pneg %p193
        $region38: #{tpu_custom_call.1} parent=11 // pred_check_branch
          %254 = sbr.rel (%p252) target = $region40
        $region39: #{tpu_custom_call.1} parent=11 // pred_region
          _
        $region40: #{tpu_custom_call.1} parent=11 // pred_fallthru
          _
      $region12: #{tpu_custom_call.1} parent=5 // pred_fallthru
        _
      %p255 = scmp.lt.s32.totalorder %s20, 2
      // Predicated region
      $region41: #{tpu_custom_call.1} parent=5 // pred_check
        %p256 = pneg %p255
      $region42: #{tpu_custom_call.1} parent=5 // pred_check_branch
        %258 = sbr.rel (%p256) target = $region44
      $region43: #{tpu_custom_call.1} parent=5 // pred_region
        // Predicated region
        $region45: #{tpu_custom_call.1} parent=43 // pred_check
          %p259 = pneg %p40
        $region46: #{tpu_custom_call.1} parent=43 // pred_check_branch
          %261 = sbr.rel (%p259) target = $region48
        $region47: #{tpu_custom_call.1} parent=43 // pred_region
          %s262 = sand.u32 %s30, 1
          %s263 = scalar_lea.sflag [#allocation3], %s262
          %s264 = sand.u32 %s30, 1
          %s265 = smul.addr %s264, 32
          %s266 = scalar_lea.vmem [#allocation2], %s265
          %s268 = ssub.s32 512, 512
          %269 = vsyncadd %s263, %s268
          %s270 = smul.addr %s20, 4
          %s271 = smul.addr %s270, 128
          %s272 = scalar_lea.hbm %s0, %s271
          %s273 = sshll.u32 %s266, 4
          %s274 = int_to_ptr.vmem [resolvable:$true] %s273
          %279 = dma.hbm_to_vmem [thread:$0]  %s272, 512, %s274, %s263, 256, 256, 16
        $region48: #{tpu_custom_call.1} parent=43 // pred_fallthru
          _
      $region44: #{tpu_custom_call.1} parent=5 // pred_fallthru
        _
      %p280 = scmp.le.s32.totalorder 1, %s20
      %p281 = scmp.lt.s32.totalorder %s20, 3
      %p282 = pnand %p280, %p281
      %p283 = pneg %p282
      // Predicated region
      $region49: #{tpu_custom_call.1} parent=5 // pred_check
        _
      $region50: #{tpu_custom_call.1} parent=5 // pred_check_branch
        %285 = sbr.rel (%p282) target = $region52
      $region51: #{tpu_custom_call.1} parent=5 // pred_region
        %s286 = ssub.s32 %s20, 1
        %s287 = sand.u32 %s33, 1
        %s288 = scalar_lea.sflag [#allocation3], %s287
        %s289 = sand.u32 %s33, 1
        %s290 = smul.addr %s289, 32
        %s291 = scalar_lea.vmem [#allocation2], %s290
        // Predicated region
        $region53: #{tpu_custom_call.1} parent=51 // pred_check
          %p292 = pneg %p46
        $region54: #{tpu_custom_call.1} parent=51 // pred_check_branch
          %294 = sbr.rel (%p292) target = $region56
        $region55: #{tpu_custom_call.1} parent=51 // pred_region
          %295 = dma.done %s288, 512
        $region56: #{tpu_custom_call.1} parent=51 // pred_fallthru
          _
        %s296 = sand.u32 %s33, 1
        %s297 = scalar_lea.sflag [#allocation3], %s296
        %s298 = sand.u32 %s33, 1
        %s299 = smul.addr %s298, 32
        %s300 = scalar_lea.vmem [#allocation2], %s299
        %p301 = pneg %p46
        %p302 = pneg %p43
        %p303 = pneg %p67
        %p304 = pneg %p64
        %p305 = pneg %p88
        %p306 = pneg %p85
        %p307 = pneg %p109
        %p308 = pneg %p106
        %p309 = pneg %p130
        %p310 = pneg %p127
        %p311 = pneg %p151
        %p312 = pneg %p148
        %p313 = pneg %p172
        %p314 = pneg %p169
        %p315 = pneg %p193
        %p316 = pneg %p190
        %p317 = pneg %p219
        %p318 = pneg %p216
        %s319 = sand.u32 %s206, 1
        %s320 = scalar_lea.sflag [#allocation4], %s319
        %s321 = sand.u32 %s206, 1
        %s322 = smul.addr %s321, 32
        %s323 = scalar_lea.vmem [#allocation5], %s322
        %v324 = vld [vmem:[%s291] sm:$0xff]
        %v325 = vld [vmem:[%s291 + $0x8] sm:$0xff]
        %v326 = vld [vmem:[%s291 + $0x10] sm:$0xff]
        %v327 = vld [vmem:[%s291 + $0x18] sm:$0xff]
        %v328 = vld [vmem:[%s2] sm:$0xff]
        %v329 = vld [vmem:[%s3] sm:$0xff]
        %331 = vset.pattern.permute.xlu0 0
        %332 = vperm.xlu0 %331, %v329
        %v333 = vpop.permute.xlu0 %332
        %vm335 = vcmask 130048
        %v337 = vsel %vm335, %v328, 0
        %339 = vmatprep.subr.mxu0 %v325
        %340 = vmatpush1.msra.mxu0 %v324
        %341 = vmatprep.subr.mxu0 %v327
        %342 = vmatpush1.msra.mxu0 %v326
        %343 = vmatprep.subr.mxu0 0.0
        %344 = vmatpush1.msra.mxu0 0.0
        %345 = vmatprep.subr.mxu0 0.0
        %346 = vmatpush1.msra.mxu0 0.0
        %347 = vmatprep.subr.mxu0 0.0
        %348 = vmatpush1.msra.mxu0 0.0
        %349 = vmatprep.subr.mxu0 0.0
        %350 = vmatpush1.msra.mxu0 0.0
        %351 = vmatprep.subr.mxu0 0.0
        %352 = vmatpush1.msra.mxu0 0.0
        %353 = vmatprep.subr.mxu0 0.0
        %354 = vmatpush1.msra.mxu0 0.0
        %355 = vmatprep.subr.mxu0 0.0
        %356 = vmatpush1.msra.mxu0 0.0
        %357 = vmatprep.subr.mxu0 0.0
        %358 = vmatpush1.msra.mxu0 0.0
        %359 = vmatprep.subr.mxu0 0.0
        %360 = vmatpush1.msra.mxu0 0.0
        %361 = vmatprep.subr.mxu0 0.0
        %362 = vmatpush1.msra.mxu0 0.0
        %363 = vmatprep.subr.mxu0 0.0
        %364 = vmatpush1.msra.mxu0 0.0
        %365 = vmatprep.subr.mxu0 0.0
        %366 = vmatpush1.msra.mxu0 0.0
        %367 = vmatprep.subr.mxu0 0.0
        %368 = vmatpush1.msra.mxu0 0.0
        %369 = vmatprep.subr.mxu0 0.0
        %370 = vmatpush1.msra.mxu0 0.0
        %371 = vmatprep.subr.mxu0 0.0
        %372 = vmatpush1.msra.mxu0 0.0
        %373 = vmatprep.subr.mxu0 0.0
        %374 = vmatpush1.msra.mxu0 0.0
        %375 = vmatprep.subr.mxu0 0.0
        %376 = vmatpush1.msra.mxu0 0.0
        %377 = vmatprep.subr.mxu0 0.0
        %378 = vmatpush1.msra.mxu0 0.0
        %379 = vmatprep.subr.mxu0 0.0
        %380 = vmatpush1.msra.mxu0 0.0
        %381 = vmatprep.subr.mxu0 0.0
        %382 = vmatpush1.msra.mxu0 0.0
        %383 = vmatprep.subr.mxu0 0.0
        %384 = vmatpush1.msra.mxu0 0.0
        %385 = vmatprep.subr.mxu0 0.0
        %386 = vmatpush1.msra.mxu0 0.0
        %387 = vmatprep.subr.mxu0 0.0
        %388 = vmatpush1.msra.mxu0 0.0
        %389 = vmatprep.subr.mxu0 0.0
        %390 = vmatpush1.msra.mxu0 0.0
        %391 = vmatprep.subr.mxu0 0.0
        %392 = vmatpush1.msra.mxu0 0.0
        %393 = vmatprep.subr.mxu0 0.0
        %394 = vmatpush1.msra.mxu0 0.0
        %395 = vmatprep.subr.mxu0 0.0
        %396 = vmatpush1.msra.mxu0 0.0
        %397 = vmatprep.subr.mxu0 0.0
        %398 = vmatpush1.msra.mxu0 0.0
        %399 = vmatprep.subr.mxu0 0.0
        %400 = vmatpush1.msra.mxu0 0.0
        %401 = vmatprep.subr.mxu0 0.0
        %402 = vmatpush1.msra.mxu0 0.0
        %403 = vmatprep.mubr.f32.mxu0 0.0
        %404 = vmatmul.mubr.f32.gmra.mrb[0].mxu0 %v337
        %v405 = vpop.f32.mrb[0].mxu0
        %v406 = vadd.f32 %v333, %v405
        %v407 = vpop.f32.mrb[0].mxu0
        %v408 = vadd.f32 %v333, %v407
        %409 = vdwg.mxu0
        %v410 = vmax.f32 %v406, 0.0
        %v411 = vmax.f32 %v408, 0.0
        %v412 = vld [vmem:[%s1] sm:$0xff]
        %v413 = vld [vmem:[%s1 + $0x8] sm:$0xff]
        %v414 = vld [vmem:[%s1 + $0x10] sm:$0x1]
        %v415 = vld [vmem:[%s1 + $0x18] sm:$0x1]
        %416 = vrot.lane.b32.xlu0 %v410, 17
        %v417 = vpop.permute.xlu0 %416
        %418 = vrot.lane.b32.xlu0 %v411, 17
        %v419 = vpop.permute.xlu0 %418
        %v420 = vlaneseq
        %v421 = vand.u32 %v420, 127
        %vm422 = vcmp.lt.s32.totalorder %v421, 17
        %v423 = vsel %vm422, %v417, %v419
        %v424 = vsel %vm422, %v419, %v417
        %v425 = vlaneseq
        %v426 = vshrl.u32 %v425, 7
        %v427 = vsub.s32 0, %v426
        %v428 = vrot.slane %v412, %v427
        %v429 = vlaneseq
        %v430 = vshrl.u32 %v429, 7
        %v431 = vsub.s32 0, %v430
        %v432 = vrot.slane %v413, %v431
        %v433 = vmul.f32 %v424, %v428
        %v434 = vmul.f32 %v423, %v432
        %435 = vrot.lane.b32.xlu0 %v410, 16
        %v436 = vpop.permute.xlu0 %435
        %437 = vrot.lane.b32.xlu0 %v411, 16
        %v438 = vpop.permute.xlu0 %437
        %vm439 = vcmp.lt.s32.totalorder %v421, 16
        %v440 = vsel %vm439, %v436, %v438
        %v441 = vsel %vm439, %v438, %v436
        %v442 = vlaneseq
        %v443 = vshrl.u32 %v442, 7
        %v444 = vsub.s32 1, %v443
        %v445 = vrot.slane %v412, %v444
        %v446 = vlaneseq
        %v447 = vshrl.u32 %v446, 7
        %v448 = vsub.s32 1, %v447
        %v449 = vrot.slane %v413, %v448
        %v450 = vmul.f32 %v441, %v445
        %v451 = vmul.f32 %v440, %v449
        %452 = vrot.lane.b32.xlu0 %v410, 15
        %v453 = vpop.permute.xlu0 %452
        %454 = vrot.lane.b32.xlu0 %v411, 15
        %v455 = vpop.permute.xlu0 %454
        %vm456 = vcmp.lt.s32.totalorder %v421, 15
        %v457 = vsel %vm456, %v453, %v455
        %v458 = vsel %vm456, %v455, %v453
        %v459 = vlaneseq
        %v460 = vshrl.u32 %v459, 7
        %v461 = vsub.s32 2, %v460
        %v462 = vrot.slane %v412, %v461
        %v463 = vlaneseq
        %v464 = vshrl.u32 %v463, 7
        %v465 = vsub.s32 2, %v464
        %v466 = vrot.slane %v413, %v465
        %v467 = vmul.f32 %v458, %v462
        %v468 = vmul.f32 %v457, %v466
        %469 = vrot.lane.b32.xlu0 %v410, 1
        %v470 = vpop.permute.xlu0 %469
        %471 = vrot.lane.b32.xlu0 %v411, 1
        %v472 = vpop.permute.xlu0 %471
        %vm473 = vcmp.lt.s32.totalorder %v421, 1
        %v474 = vsel %vm473, %v470, %v472
        %v475 = vsel %vm473, %v472, %v470
        %v476 = vlaneseq
        %v477 = vshrl.u32 %v476, 7
        %v478 = vsub.s32 3, %v477
        %v479 = vrot.slane %v412, %v478
        %v480 = vlaneseq
        %v481 = vshrl.u32 %v480, 7
        %v482 = vsub.s32 3, %v481
        %v483 = vrot.slane %v413, %v482
        %v484 = vmul.f32 %v475, %v479
        %v485 = vmul.f32 %v474, %v483
        %486 = vrot.lane.b32.xlu0 %v410, 127
        %v487 = vpop.permute.xlu0 %486
        %488 = vrot.lane.b32.xlu0 %v411, 127
        %v489 = vpop.permute.xlu0 %488
        %vm490 = vcmp.lt.s32.totalorder %v421, 127
        %v491 = vsel %vm490, %v487, %v489
        %v492 = vsel %vm490, %v489, %v487
        %v493 = vlaneseq
        %v494 = vshrl.u32 %v493, 7
        %v495 = vsub.s32 5, %v494
        %v496 = vrot.slane %v412, %v495
        %v497 = vlaneseq
        %v498 = vshrl.u32 %v497, 7
        %v499 = vsub.s32 5, %v498
        %v500 = vrot.slane %v413, %v499
        %v501 = vmul.f32 %v491, %v496
        %v502 = vmul.f32 %v492, %v500
        %503 = vrot.lane.b32.xlu0 %v410, 113
        %v504 = vpop.permute.xlu0 %503
        %505 = vrot.lane.b32.xlu0 %v411, 113
        %v506 = vpop.permute.xlu0 %505
        %vm507 = vcmp.lt.s32.totalorder %v421, 113
        %v508 = vsel %vm507, %v504, %v506
        %v509 = vsel %vm507, %v506, %v504
        %v510 = vlaneseq
        %v511 = vshrl.u32 %v510, 7
        %v512 = vsub.s32 6, %v511
        %v513 = vrot.slane %v412, %v512
        %v514 = vlaneseq
        %v515 = vshrl.u32 %v514, 7
        %v516 = vsub.s32 6, %v515
        %v517 = vrot.slane %v413, %v516
        %v518 = vmul.f32 %v508, %v513
        %v519 = vmul.f32 %v509, %v517
        %520 = vrot.lane.b32.xlu0 %v410, 112
        %v521 = vpop.permute.xlu0 %520
        %522 = vrot.lane.b32.xlu0 %v411, 112
        %v523 = vpop.permute.xlu0 %522
        %vm524 = vcmp.lt.s32.totalorder %v421, 112
        %v525 = vsel %vm524, %v521, %v523
        %v526 = vsel %vm524, %v523, %v521
        %v527 = vlaneseq
        %v528 = vshrl.u32 %v527, 7
        %v529 = vsub.s32 7, %v528
        %v530 = vrot.slane %v412, %v529
        %v531 = vlaneseq
        %v532 = vshrl.u32 %v531, 7
        %v533 = vsub.s32 7, %v532
        %v534 = vrot.slane %v413, %v533
        %v535 = vmul.f32 %v525, %v530
        %v536 = vmul.f32 %v526, %v534
        %537 = vrot.lane.b32.xlu0 %v410, 111
        %v538 = vpop.permute.xlu0 %537
        %539 = vrot.lane.b32.xlu0 %v411, 111
        %v540 = vpop.permute.xlu0 %539
        %vm541 = vcmp.lt.s32.totalorder %v421, 111
        %v542 = vsel %vm541, %v538, %v540
        %v543 = vsel %vm541, %v540, %v538
        %v544 = vlaneseq
        %v545 = vshrl.u32 %v544, 7
        %v546 = vsub.s32 0, %v545
        %v547 = vrot.slane %v414, %v546
        %v548 = vlaneseq
        %v549 = vshrl.u32 %v548, 7
        %v550 = vsub.s32 0, %v549
        %v551 = vrot.slane %v415, %v550
        %v552 = vmul.f32 %v542, %v547
        %v553 = vmul.f32 %v543, %v551
        %v554 = vld [vmem:[%s4] sm:$0xf]
        %v555 = vld [vmem:[%s5] sm:$0xf]
        %557 = vset.pattern.permute.xlu0 0
        %558 = vperm.xlu0 %557, %v555
        %v559 = vpop.permute.xlu0 %558
        %vm561 = vcmask 588800
        %v563 = vsel %vm561, %v554, 0
        %565 = vmatprep.subr.mxu0 %v434
        %566 = vmatpush1.msra.mxu0 %v433
        %567 = vmatprep.subr.mxu0 %v451
        %568 = vmatpush1.msra.mxu0 %v450
        %569 = vmatprep.subr.mxu0 %v468
        %570 = vmatpush1.msra.mxu0 %v467
        %571 = vmatprep.subr.mxu0 %v485
        %572 = vmatpush1.msra.mxu0 %v484
        %573 = vmatprep.subr.mxu0 %v411
        %574 = vmatpush1.msra.mxu0 %v410
        %575 = vmatprep.subr.mxu0 %v502
        %576 = vmatpush1.msra.mxu0 %v501
        %577 = vmatprep.subr.mxu0 %v519
        %578 = vmatpush1.msra.mxu0 %v518
        %579 = vmatprep.subr.mxu0 %v536
        %580 = vmatpush1.msra.mxu0 %v535
        %581 = vmatprep.subr.mxu0 %v553
        %582 = vmatpush1.msra.mxu0 %v552
        %583 = vmatprep.subr.mxu0 0.0
        %584 = vmatpush1.msra.mxu0 0.0
        %585 = vmatprep.subr.mxu0 0.0
        %586 = vmatpush1.msra.mxu0 0.0
        %587 = vmatprep.subr.mxu0 0.0
        %588 = vmatpush1.msra.mxu0 0.0
        %589 = vmatprep.subr.mxu0 0.0
        %590 = vmatpush1.msra.mxu0 0.0
        %591 = vmatprep.subr.mxu0 0.0
        %592 = vmatpush1.msra.mxu0 0.0
        %593 = vmatprep.subr.mxu0 0.0
        %594 = vmatpush1.msra.mxu0 0.0
        %595 = vmatprep.subr.mxu0 0.0
        %596 = vmatpush1.msra.mxu0 0.0
        %597 = vmatprep.subr.mxu0 0.0
        %598 = vmatpush1.msra.mxu0 0.0
        %599 = vmatprep.subr.mxu0 0.0
        %600 = vmatpush1.msra.mxu0 0.0
        %601 = vmatprep.subr.mxu0 0.0
        %602 = vmatpush1.msra.mxu0 0.0
        %603 = vmatprep.subr.mxu0 0.0
        %604 = vmatpush1.msra.mxu0 0.0
        %605 = vmatprep.subr.mxu0 0.0
        %606 = vmatpush1.msra.mxu0 0.0
        %607 = vmatprep.subr.mxu0 0.0
        %608 = vmatpush1.msra.mxu0 0.0
        %609 = vmatprep.subr.mxu0 0.0
        %610 = vmatpush1.msra.mxu0 0.0
        %611 = vmatprep.subr.mxu0 0.0
        %612 = vmatpush1.msra.mxu0 0.0
        %613 = vmatprep.subr.mxu0 0.0
        %614 = vmatpush1.msra.mxu0 0.0
        %615 = vmatprep.subr.mxu0 0.0
        %616 = vmatpush1.msra.mxu0 0.0
        %617 = vmatprep.subr.mxu0 0.0
        %618 = vmatpush1.msra.mxu0 0.0
        %619 = vmatprep.subr.mxu0 0.0
        %620 = vmatpush1.msra.mxu0 0.0
        %621 = vmatprep.subr.mxu0 0.0
        %622 = vmatpush1.msra.mxu0 0.0
        %623 = vmatprep.subr.mxu0 0.0
        %624 = vmatpush1.msra.mxu0 0.0
        %625 = vmatprep.subr.mxu0 0.0
        %626 = vmatpush1.msra.mxu0 0.0
        %627 = vmatprep.subr.mxu0 0.0
        %628 = vmatpush1.msra.mxu0 0.0
        %629 = vmatprep.mubr.f32.mxu0 0.0
        %630 = vmatmul.mubr.f32.gmra.mrb[0].mxu0 %v563
        %v631 = vpop.f32.mrb[0].mxu0
        %v632 = vadd.f32 %v559, %v631
        %v633 = vpop.f32.mrb[0].mxu0
        %v634 = vadd.f32 %v559, %v633
        %635 = vdwg.mxu0
        %v636 = vmax.f32 %v632, 0.0
        %v637 = vmax.f32 %v634, 0.0
        %v638 = vld [vmem:[%s6] sm:$0xff]
        %v639 = vld [vmem:[%s6 + $0x8] sm:$0xff]
        %v640 = vld [vmem:[%s7] sm:$0xff]
        %v641 = vld [vmem:[%s7 + $0x8] sm:$0xff]
        %643 = vset.pattern.permute.xlu0 0
        %644 = vperm.xlu0 %643, %v640
        %v645 = vpop.permute.xlu0 %644
        %648 = vset.pattern.permute.xlu0 0
        %649 = vperm.xlu0 %648, %v641
        %v650 = vpop.permute.xlu0 %649
        %vm652 = vcmask 31744
        %v654 = vsel %vm652, %v638, 0
        %v657 = vsel %vm652, %v639, 0
        %vm659 = vcmask 1043456
        %v661 = vsel %vm659, %v636, 0
        %v664 = vsel %vm659, %v637, 0
        %666 = vmatprep.subr.mxu0 %v664
        %667 = vmatpush1.msra.mxu0 %v661
        %668 = vmatprep.subr.mxu0 0.0
        %669 = vmatpush1.msra.mxu0 0.0
        %670 = vmatprep.subr.mxu0 0.0
        %671 = vmatpush1.msra.mxu0 0.0
        %672 = vmatprep.subr.mxu0 0.0
        %673 = vmatpush1.msra.mxu0 0.0
        %674 = vmatprep.subr.mxu0 0.0
        %675 = vmatpush1.msra.mxu0 0.0
        %676 = vmatprep.subr.mxu0 0.0
        %677 = vmatpush1.msra.mxu0 0.0
        %678 = vmatprep.subr.mxu0 0.0
        %679 = vmatpush1.msra.mxu0 0.0
        %680 = vmatprep.subr.mxu0 0.0
        %681 = vmatpush1.msra.mxu0 0.0
        %682 = vmatprep.subr.mxu0 0.0
        %683 = vmatpush1.msra.mxu0 0.0
        %684 = vmatprep.subr.mxu0 0.0
        %685 = vmatpush1.msra.mxu0 0.0
        %686 = vmatprep.subr.mxu0 0.0
        %687 = vmatpush1.msra.mxu0 0.0
        %688 = vmatprep.subr.mxu0 0.0
        %689 = vmatpush1.msra.mxu0 0.0
        %690 = vmatprep.subr.mxu0 0.0
        %691 = vmatpush1.msra.mxu0 0.0
        %692 = vmatprep.subr.mxu0 0.0
        %693 = vmatpush1.msra.mxu0 0.0
        %694 = vmatprep.subr.mxu0 0.0
        %695 = vmatpush1.msra.mxu0 0.0
        %696 = vmatprep.subr.mxu0 0.0
        %697 = vmatpush1.msra.mxu0 0.0
        %698 = vmatprep.subr.mxu0 0.0
        %699 = vmatpush1.msra.mxu0 0.0
        %700 = vmatprep.subr.mxu0 0.0
        %701 = vmatpush1.msra.mxu0 0.0
        %702 = vmatprep.subr.mxu0 0.0
        %703 = vmatpush1.msra.mxu0 0.0
        %704 = vmatprep.subr.mxu0 0.0
        %705 = vmatpush1.msra.mxu0 0.0
        %706 = vmatprep.subr.mxu0 0.0
        %707 = vmatpush1.msra.mxu0 0.0
        %708 = vmatprep.subr.mxu0 0.0
        %709 = vmatpush1.msra.mxu0 0.0
        %710 = vmatprep.subr.mxu0 0.0
        %711 = vmatpush1.msra.mxu0 0.0
        %712 = vmatprep.subr.mxu0 0.0
        %713 = vmatpush1.msra.mxu0 0.0
        %714 = vmatprep.subr.mxu0 0.0
        %715 = vmatpush1.msra.mxu0 0.0
        %716 = vmatprep.subr.mxu0 0.0
        %717 = vmatpush1.msra.mxu0 0.0
        %718 = vmatprep.subr.mxu0 0.0
        %719 = vmatpush1.msra.mxu0 0.0
        %720 = vmatprep.subr.mxu0 0.0
        %721 = vmatpush1.msra.mxu0 0.0
        %722 = vmatprep.subr.mxu0 0.0
        %723 = vmatpush1.msra.mxu0 0.0
        %724 = vmatprep.subr.mxu0 0.0
        %725 = vmatpush1.msra.mxu0 0.0
        %726 = vmatprep.subr.mxu0 0.0
        %727 = vmatpush1.msra.mxu0 0.0
        %728 = vmatprep.subr.mxu0 0.0
        %729 = vmatpush1.msra.mxu0 0.0
        %730 = vmatprep.mubr.f32.mxu0 0.0
        %731 = vmatmul.mubr.f32.gmra.mrb[0].mxu0 %v654
        %v732 = vpop.f32.mrb[0].mxu0
        %v733 = vadd.f32 %v645, %v732
        %v734 = vpop.f32.mrb[0].mxu0
        %v735 = vadd.f32 %v645, %v734
        %736 = vmatprep.mubr.f32.mxu0 0.0
        %737 = vmatmul.mubr.f32.gmra.mrb[0].mxu0 %v657
        %v738 = vpop.f32.mrb[0].mxu0
        %v739 = vadd.f32 %v650, %v738
        %v740 = vpop.f32.mrb[0].mxu0
        %v741 = vadd.f32 %v650, %v740
        %742 = vdwg.mxu0
        %v743 = vadd.f32 %v733, %v324
        %v744 = vadd.f32 %v735, %v325
        %v745 = vadd.f32 %v739, %v326
        %v746 = vadd.f32 %v741, %v327
        %v747 = vmax.f32 %v743, 0.0
        %v748 = vmax.f32 %v744, 0.0
        %v749 = vmax.f32 %v745, 0.0
        %v750 = vmax.f32 %v746, 0.0
        %751 = vst [vmem:[%s323] sm:$0xff] %v747
        %752 = vst [vmem:[%s323 + $0x8] sm:$0xff] %v748
        %753 = vst [vmem:[%s323 + $0x10] sm:$0xff] %v749
        %754 = vst [vmem:[%s323 + $0x18] sm:$0xff] %v750
        %s755 = sand.u32 %s206, 1
        %s756 = scalar_lea.sflag [#allocation4], %s755
        %s757 = sand.u32 %s206, 1
        %s758 = smul.addr %s757, 32
        %s759 = scalar_lea.vmem [#allocation5], %s758
        // Predicated region
        $region57: #{tpu_custom_call.1} parent=51 // pred_check
          %p760 = pneg %p216
        $region58: #{tpu_custom_call.1} parent=51 // pred_check_branch
          %762 = sbr.rel (%p760) target = $region60
        $region59: #{tpu_custom_call.1} parent=51 // pred_region
          %s764 = ssub.s32 512, 512
          %765 = vsyncadd %s756, %s764
          %s766 = smul.addr %s25, 4
          %s767 = smul.addr %s766, 128
          %s768 = scalar_lea.hbm %s8, %s767
          %s769 = sshll.u32 %s759, 4
          %s770 = int_to_ptr.vmem [resolvable:$true] %s769
          %775 = dma.vmem_to_hbm [thread:$0]  %s770, 512, %s768, %s756, 256, 256, 16
        $region60: #{tpu_custom_call.1} parent=51 // pred_fallthru
          _
      $region52: #{tpu_custom_call.1} parent=5 // pred_fallthru
        _
      %p776 = scmp.le.s32.totalorder 2, %s20
      // Predicated region
      $region61: #{tpu_custom_call.1} parent=5 // pred_check
        %p777 = pneg %p776
      $region62: #{tpu_custom_call.1} parent=5 // pred_check_branch
        %779 = sbr.rel (%p777) target = $region64
      $region63: #{tpu_custom_call.1} parent=5 // pred_region
        %s780 = ssub.s32 %s20, 2
        // Predicated region
        $region65: #{tpu_custom_call.1} parent=63 // pred_check
          %p781 = pneg %p222
        $region66: #{tpu_custom_call.1} parent=63 // pred_check_branch
          %783 = sbr.rel (%p781) target = $region68
        $region67: #{tpu_custom_call.1} parent=63 // pred_region
          %s784 = sand.u32 %s207, 1
          %s785 = scalar_lea.sflag [#allocation4], %s784
          %s786 = sand.u32 %s207, 1
          %s787 = smul.addr %s786, 32
          %s788 = scalar_lea.vmem [#allocation5], %s787
          %789 = dma.done %s785, 512
        $region68: #{tpu_custom_call.1} parent=63 // pred_fallthru
          _
      $region64: #{tpu_custom_call.1} parent=5 // pred_fallthru
        _
    $region6: #{tpu_custom_call.1} parent=1 // loop_footer
      %s24 = sadd.s32 1, %s20
    $region7: #{tpu_custom_call.1} parent=1 // loop_footer_branch
      %19 = sbr.rel target = $region3
    $region8: #{tpu_custom_call.1} parent=1 // loop_exit
      _
    %790 = vsyncpa [#allocation3], 1
    %s791 = scalar_lea.sflag [#allocation3], 1
    %792 = vsyncpa %s791, 1
    %793 = vsyncpa [#allocation4], 1
    %s794 = scalar_lea.sflag [#allocation4], 1
    %795 = vsyncpa %s794, 1

</llo_original>
